<compile_context>
chip_gen: v7x
topology: tpu7x:2x2x1
jax: 0.10.0
libtpu: 0.0.40
codegen_flags: <defaults>
</compile_context>

<pallas_src>
import jax
import jax.numpy as jnp
from jax import lax
from jax.experimental import pallas as pl
from jax.experimental.pallas import tpu as pltpu

_H1, _H2, _H3 = 512, 256, 128


def _ranknet_kernel(x1_ref, x2_ref,
                    w1_ref, b1_ref, w2_ref, b2_ref,
                    w3_ref, b3_ref, w4_ref,
                    out_ref):
    def dense_relu(h, w_ref, b_ref, out_dtype):
        a = jnp.dot(h, w_ref[...], preferred_element_type=jnp.float32)  # MXU, f32 acc
        a = jnp.maximum(a + b_ref[...], 0.0)                            # f32 VPU
        return a.astype(out_dtype)

    def mlp3(x_ref):
        # f32 rows come straight from HBM; cast to bf16 in-kernel (no
        # wrapper-side astype/pad materialization of the full batch).
        h = x_ref[...].astype(jnp.bfloat16)
        h = dense_relu(h, w1_ref, b1_ref, jnp.bfloat16)     # (bb, 512)
        h = dense_relu(h, w2_ref, b2_ref, jnp.bfloat16)     # (bb, 256)
        return dense_relu(h, w3_ref, b3_ref, jnp.float32)   # (bb, 128) f32

    # Two candidates sequentially (no concat copy, lower peak VMEM). The last
    # layer is linear, so s1 - s2 = (h3_1 - h3_2) @ w4 and b4 cancels.
    delta = mlp3(x1_ref) - mlp3(x2_ref)                      # (bb, 128) f32

    # Lane-dense head: (1,128) . (bb,128)^T -> (1, bb) score row (MXU), f32
    # kept for the cancellation-sensitive s1-s2; full-lane sigmoid + unmasked
    # lane-dense store instead of a masked 1-lane-wide column.
    score = lax.dot_general(w4_ref[...], delta, (((1,), (1,)), ((), ())),
                            preferred_element_type=jnp.float32)  # (1, bb)
    out_ref[...] = jax.nn.sigmoid(score)                          # EUP


def _choose_block(batch):
    """Pick the batch tile size.

    B <= 256: one exact tile (no padding, no wasted MXU rows).
    B >  256: big tiles (target 2048 -> ~1.5 GFLOP/tile, amortizes the
    ~0.35us per-step overhead) but capped at ceil(B/2) rounded up to 128 so
    the grid has >= 2 steps and both v7x TensorCores get work.
    """
    if batch <= 256:
        return batch
    half = ((batch + 1) // 2 + 127) // 128 * 128
    return min(2048, half)


def ranknet_forward(x1, x2, params):
    """x1, x2: (B, num_features) float32. Returns (B, 1) float32 probabilities."""
    B, F = x1.shape
    block_b = _choose_block(B)
    grid = (pl.cdiv(B, block_b),)

    # bf16 MXU operands for the big layers (cast once per call, ~360 KB);
    # biases and the head weight stay f32.
    w1 = params["w1"].astype(jnp.bfloat16)
    w2 = params["w2"].astype(jnp.bfloat16)
    w3 = params["w3"].astype(jnp.bfloat16)
    w4_row = params["w4"].reshape(1, -1).astype(jnp.float32)      # (1, 128)
    b1, b2, b3 = params["b1"], params["b2"], params["b3"]         # (1, N) f32

    x_spec = pl.BlockSpec((block_b, F), lambda i: (i, 0))

    def resident(shape):  # weights/biases: constant index -> VMEM-resident
        return pl.BlockSpec(shape, lambda i: (0, 0))

    macs = F * _H1 + _H1 * _H2 + _H2 * _H3
    flops = int(B) * (4 * macs + 2 * _H3)
    bytes_accessed = (2 * B * F * 4 + B * 4
                      + 2 * (macs + _H3) + 4 * (_H1 + _H2 + _H3))

    out = pl.pallas_call(
        _ranknet_kernel,
        out_shape=jax.ShapeDtypeStruct((1, B), jnp.float32),      # lane-dense row
        grid=grid,
        in_specs=[
            x_spec, x_spec,
            resident(w1.shape), resident(b1.shape),
            resident(w2.shape), resident(b2.shape),
            resident(w3.shape), resident(b3.shape),
            resident(w4_row.shape),
        ],
        out_specs=pl.BlockSpec((1, block_b), lambda i: (0, i)),
        compiler_params=pltpu.CompilerParams(
            # Batch tiles are independent -> shard across TensorCores on v7x.
            dimension_semantics=("parallel",),
            # Headroom for block_b=2048 (~25 MB live) while staying under
            # v7x's 64 MiB physical VMEM; plenty of slack on v5e/v6e.
            vmem_limit_bytes=56 * 1024 * 1024,
        ),
        cost_estimate=pl.CostEstimate(flops=flops,
                                      transcendentals=int(B),
                                      bytes_accessed=int(bytes_accessed)),
    )(x1, x2, w1, b1, w2, b2, w3, b3, w4_row)
    return out.reshape(B, 1)


def init_params(key, num_features):
    """Deterministic init mimicking PyTorch Linear default (U[-1/sqrt(fan_in), +])."""
    dims = [(num_features, _H1), (_H1, _H2), (_H2, _H3), (_H3, 1)]
    params = {}
    for i, (fan_in, fan_out) in enumerate(dims, start=1):
        key, kw, kb = jax.random.split(key, 3)
        bound = 1.0 / jnp.sqrt(jnp.float32(fan_in))
        params[f"w{i}"] = jax.random.uniform(
            kw, (fan_in, fan_out), jnp.float32, -bound, bound)
        params[f"b{i}"] = jax.random.uniform(
            kb, (1, fan_out), jnp.float32, -bound, bound)
    return params


def ranknet_reference(x1, x2, params):
    """Pure-JAX f32 reference for correctness checking (b4 included; it cancels)."""
    def mlp(x):
        h = jnp.maximum(x @ params["w1"] + params["b1"], 0.0)
        h = jnp.maximum(h @ params["w2"] + params["b2"], 0.0)
        h = jnp.maximum(h @ params["w3"] + params["b3"], 0.0)
        return h @ params["w4"] + params["b4"]
    return jax.nn.sigmoid(mlp(x1) - mlp(x2))


if __name__ == "__main__":
    num_features = 32
    batch = 8

    key = jax.random.PRNGKey(0)
    kp, k1, k2 = jax.random.split(key, 3)
    params = init_params(kp, num_features)
    x1 = jax.random.normal(k1, (batch, num_features), jnp.float32)
    x2 = jax.random.normal(k2, (batch, num_features), jnp.float32)

    out = jax.block_until_ready(ranknet_forward(x1, x2, params))
    ref = ranknet_reference(x1, x2, params)

    assert out.shape == (batch, 1)
    # bf16 MXU operands with f32 accumulation -> relaxed tolerance vs f32 ref.
    assert jnp.allclose(out, ref, atol=2e-2, rtol=2e-2)
    print("KERNEL_OK")
</pallas_src>

<mosaic_0001>
module attributes {stable_mosaic.version = 11 : i64} {
  func.func @_ranknet_kernel(%arg0: i32, %arg1: memref<8x32xf32, #tpu.memory_space<vmem>>, %arg2: memref<8x32xf32, #tpu.memory_space<vmem>>, %arg3: memref<32x512xbf16, #tpu.memory_space<vmem>>, %arg4: memref<1x512xf32, #tpu.memory_space<vmem>>, %arg5: memref<512x256xbf16, #tpu.memory_space<vmem>>, %arg6: memref<1x256xf32, #tpu.memory_space<vmem>>, %arg7: memref<256x128xbf16, #tpu.memory_space<vmem>>, %arg8: memref<1x128xf32, #tpu.memory_space<vmem>>, %arg9: memref<1x128xf32, #tpu.memory_space<vmem>>, %arg10: memref<1x8xf32, #tpu.memory_space<vmem>>) attributes {dimension_semantics = [#tpu.dimension_semantics<parallel>], iteration_bounds = array<i64: 1>, scalar_prefetch = 0 : i64, scratch_operands = 0 : i64, tpu.core_type = #tpu.core_type<tc>, window_params = [{transform_indices = @transform_0, window_bounds = array<i64: 8, 32>}, {transform_indices = @transform_1, window_bounds = array<i64: 8, 32>}, {pipeline_mode = #tpu.pipeline_mode<synchronous>, transform_indices = @transform_2, window_bounds = array<i64: 32, 512>}, {pipeline_mode = #tpu.pipeline_mode<synchronous>, transform_indices = @transform_3, window_bounds = array<i64: 1, 512>}, {pipeline_mode = #tpu.pipeline_mode<synchronous>, transform_indices = @transform_4, window_bounds = array<i64: 512, 256>}, {pipeline_mode = #tpu.pipeline_mode<synchronous>, transform_indices = @transform_5, window_bounds = array<i64: 1, 256>}, {pipeline_mode = #tpu.pipeline_mode<synchronous>, transform_indices = @transform_6, window_bounds = array<i64: 256, 128>}, {pipeline_mode = #tpu.pipeline_mode<synchronous>, transform_indices = @transform_7, window_bounds = array<i64: 1, 128>}, {pipeline_mode = #tpu.pipeline_mode<synchronous>, transform_indices = @transform_8, window_bounds = array<i64: 1, 128>}, {transform_indices = @transform_9, window_bounds = array<i64: 1, 8>}]} {
    %c0 = arith.constant 0 : index
    %c0_0 = arith.constant 0 : index
    %0 = vector.load %arg1[%c0, %c0_0] : memref<8x32xf32, #tpu.memory_space<vmem>>, vector<8x32xf32>
    %1 = arith.truncf %0 : vector<8x32xf32> to vector<8x32xbf16>
    %c0_1 = arith.constant 0 : index
    %c0_2 = arith.constant 0 : index
    %2 = vector.load %arg3[%c0_1, %c0_2] : memref<32x512xbf16, #tpu.memory_space<vmem>>, vector<32x512xbf16>
    %cst = arith.constant dense<0.000000e+00> : vector<8x512xf32>
    %3 = tpu.matmul %1, %2, %cst {dimension_numbers = #tpu.dot_dimension_numbers<[1], [0], [0], [1], [0, 0, 1, 1], [], []>} : vector<8x32xbf16>, vector<32x512xbf16>, vector<8x512xf32> -> vector<8x512xf32>
    %c0_3 = arith.constant 0 : index
    %c0_4 = arith.constant 0 : index
    %4 = vector.load %arg4[%c0_3, %c0_4] : memref<1x512xf32, #tpu.memory_space<vmem>>, vector<1x512xf32>
    %5 = vector.broadcast %4 : vector<1x512xf32> to vector<8x512xf32>
    %6 = arith.addf %3, %5 : vector<8x512xf32>
    %cst_5 = arith.constant 0.000000e+00 : f32
    %7 = vector.broadcast %cst_5 : f32 to vector<8x512xf32>
    %8 = arith.maximumf %6, %7 : vector<8x512xf32>
    %9 = arith.truncf %8 : vector<8x512xf32> to vector<8x512xbf16>
    %c0_6 = arith.constant 0 : index
    %c0_7 = arith.constant 0 : index
    %10 = vector.load %arg5[%c0_6, %c0_7] : memref<512x256xbf16, #tpu.memory_space<vmem>>, vector<512x256xbf16>
    %cst_8 = arith.constant dense<0.000000e+00> : vector<8x256xf32>
    %11 = tpu.matmul %9, %10, %cst_8 {dimension_numbers = #tpu.dot_dimension_numbers<[1], [0], [0], [1], [0, 0, 1, 1], [], []>} : vector<8x512xbf16>, vector<512x256xbf16>, vector<8x256xf32> -> vector<8x256xf32>
    %c0_9 = arith.constant 0 : index
    %c0_10 = arith.constant 0 : index
    %12 = vector.load %arg6[%c0_9, %c0_10] : memref<1x256xf32, #tpu.memory_space<vmem>>, vector<1x256xf32>
    %13 = vector.broadcast %12 : vector<1x256xf32> to vector<8x256xf32>
    %14 = arith.addf %11, %13 : vector<8x256xf32>
    %cst_11 = arith.constant 0.000000e+00 : f32
    %15 = vector.broadcast %cst_11 : f32 to vector<8x256xf32>
    %16 = arith.maximumf %14, %15 : vector<8x256xf32>
    %17 = arith.truncf %16 : vector<8x256xf32> to vector<8x256xbf16>
    %c0_12 = arith.constant 0 : index
    %c0_13 = arith.constant 0 : index
    %18 = vector.load %arg7[%c0_12, %c0_13] : memref<256x128xbf16, #tpu.memory_space<vmem>>, vector<256x128xbf16>
    %cst_14 = arith.constant dense<0.000000e+00> : vector<8x128xf32>
    %19 = tpu.matmul %17, %18, %cst_14 {dimension_numbers = #tpu.dot_dimension_numbers<[1], [0], [0], [1], [0, 0, 1, 1], [], []>} : vector<8x256xbf16>, vector<256x128xbf16>, vector<8x128xf32> -> vector<8x128xf32>
    %c0_15 = arith.constant 0 : index
    %c0_16 = arith.constant 0 : index
    %20 = vector.load %arg8[%c0_15, %c0_16] : memref<1x128xf32, #tpu.memory_space<vmem>>, vector<1x128xf32>
    %21 = vector.broadcast %20 : vector<1x128xf32> to vector<8x128xf32>
    %22 = arith.addf %19, %21 : vector<8x128xf32>
    %cst_17 = arith.constant 0.000000e+00 : f32
    %23 = vector.broadcast %cst_17 : f32 to vector<8x128xf32>
    %24 = arith.maximumf %22, %23 : vector<8x128xf32>
    %c0_18 = arith.constant 0 : index
    %c0_19 = arith.constant 0 : index
    %25 = vector.load %arg2[%c0_18, %c0_19] : memref<8x32xf32, #tpu.memory_space<vmem>>, vector<8x32xf32>
    %26 = arith.truncf %25 : vector<8x32xf32> to vector<8x32xbf16>
    %c0_20 = arith.constant 0 : index
    %c0_21 = arith.constant 0 : index
    %27 = vector.load %arg3[%c0_20, %c0_21] : memref<32x512xbf16, #tpu.memory_space<vmem>>, vector<32x512xbf16>
    %cst_22 = arith.constant dense<0.000000e+00> : vector<8x512xf32>
    %28 = tpu.matmul %26, %27, %cst_22 {dimension_numbers = #tpu.dot_dimension_numbers<[1], [0], [0], [1], [0, 0, 1, 1], [], []>} : vector<8x32xbf16>, vector<32x512xbf16>, vector<8x512xf32> -> vector<8x512xf32>
    %c0_23 = arith.constant 0 : index
    %c0_24 = arith.constant 0 : index
    %29 = vector.load %arg4[%c0_23, %c0_24] : memref<1x512xf32, #tpu.memory_space<vmem>>, vector<1x512xf32>
    %30 = vector.broadcast %29 : vector<1x512xf32> to vector<8x512xf32>
    %31 = arith.addf %28, %30 : vector<8x512xf32>
    %cst_25 = arith.constant 0.000000e+00 : f32
    %32 = vector.broadcast %cst_25 : f32 to vector<8x512xf32>
    %33 = arith.maximumf %31, %32 : vector<8x512xf32>
    %34 = arith.truncf %33 : vector<8x512xf32> to vector<8x512xbf16>
    %c0_26 = arith.constant 0 : index
    %c0_27 = arith.constant 0 : index
    %35 = vector.load %arg5[%c0_26, %c0_27] : memref<512x256xbf16, #tpu.memory_space<vmem>>, vector<512x256xbf16>
    %cst_28 = arith.constant dense<0.000000e+00> : vector<8x256xf32>
    %36 = tpu.matmul %34, %35, %cst_28 {dimension_numbers = #tpu.dot_dimension_numbers<[1], [0], [0], [1], [0, 0, 1, 1], [], []>} : vector<8x512xbf16>, vector<512x256xbf16>, vector<8x256xf32> -> vector<8x256xf32>
    %c0_29 = arith.constant 0 : index
    %c0_30 = arith.constant 0 : index
    %37 = vector.load %arg6[%c0_29, %c0_30] : memref<1x256xf32, #tpu.memory_space<vmem>>, vector<1x256xf32>
    %38 = vector.broadcast %37 : vector<1x256xf32> to vector<8x256xf32>
    %39 = arith.addf %36, %38 : vector<8x256xf32>
    %cst_31 = arith.constant 0.000000e+00 : f32
    %40 = vector.broadcast %cst_31 : f32 to vector<8x256xf32>
    %41 = arith.maximumf %39, %40 : vector<8x256xf32>
    %42 = arith.truncf %41 : vector<8x256xf32> to vector<8x256xbf16>
    %c0_32 = arith.constant 0 : index
    %c0_33 = arith.constant 0 : index
    %43 = vector.load %arg7[%c0_32, %c0_33] : memref<256x128xbf16, #tpu.memory_space<vmem>>, vector<256x128xbf16>
    %cst_34 = arith.constant dense<0.000000e+00> : vector<8x128xf32>
    %44 = tpu.matmul %42, %43, %cst_34 {dimension_numbers = #tpu.dot_dimension_numbers<[1], [0], [0], [1], [0, 0, 1, 1], [], []>} : vector<8x256xbf16>, vector<256x128xbf16>, vector<8x128xf32> -> vector<8x128xf32>
    %c0_35 = arith.constant 0 : index
    %c0_36 = arith.constant 0 : index
    %45 = vector.load %arg8[%c0_35, %c0_36] : memref<1x128xf32, #tpu.memory_space<vmem>>, vector<1x128xf32>
    %46 = vector.broadcast %45 : vector<1x128xf32> to vector<8x128xf32>
    %47 = arith.addf %44, %46 : vector<8x128xf32>
    %cst_37 = arith.constant 0.000000e+00 : f32
    %48 = vector.broadcast %cst_37 : f32 to vector<8x128xf32>
    %49 = arith.maximumf %47, %48 : vector<8x128xf32>
    %50 = arith.subf %24, %49 : vector<8x128xf32>
    %c0_38 = arith.constant 0 : index
    %c0_39 = arith.constant 0 : index
    %51 = vector.load %arg9[%c0_38, %c0_39] : memref<1x128xf32, #tpu.memory_space<vmem>>, vector<1x128xf32>
    %cst_40 = arith.constant dense<0.000000e+00> : vector<1x8xf32>
    %52 = tpu.matmul %51, %50, %cst_40 {dimension_numbers = #tpu.dot_dimension_numbers<[1], [1], [0], [0], [0, 0, 1, 0], [], []>} : vector<1x128xf32>, vector<8x128xf32>, vector<1x8xf32> -> vector<1x8xf32>
    %53 = arith.negf %52 : vector<1x8xf32>
    %54 = math.exp %53 : vector<1x8xf32>
    %cst_41 = arith.constant 1.000000e+00 : f32
    %55 = vector.broadcast %cst_41 : f32 to vector<1x8xf32>
    %56 = arith.addf %55, %54 : vector<1x8xf32>
    %57 = arith.divf %55, %56 : vector<1x8xf32>
    %c0_42 = arith.constant 0 : index
    %c0_43 = arith.constant 0 : index
    %58 = vector.load %arg10[%c0_42, %c0_43] : memref<1x8xf32, #tpu.memory_space<vmem>>, vector<1x8xf32>
    tpu.vector_store %arg10[%c0_42, %c0_43], %57 {strides = array<i32>} : memref<1x8xf32, #tpu.memory_space<vmem>>, vector<1x8xf32>,
    return
  }
  func.func @transform_0(%arg0: i32) -> (i32, i32) {
    %c0_i32 = arith.constant 0 : i32
    %c0_i32_0 = arith.constant 0 : i32
    return %arg0, %c0_i32 : i32, i32
  }
  func.func @transform_1(%arg0: i32) -> (i32, i32) {
    %c0_i32 = arith.constant 0 : i32
    %c0_i32_0 = arith.constant 0 : i32
    return %arg0, %c0_i32 : i32, i32
  }
  func.func @transform_2(%arg0: i32) -> (i32, i32) {
    %c0_i32 = arith.constant 0 : i32
    %c0_i32_0 = arith.constant 0 : i32
    %c0_i32_1 = arith.constant 0 : i32
    return %c0_i32, %c0_i32_0 : i32, i32
  }
  func.func @transform_3(%arg0: i32) -> (i32, i32) {
    %c0_i32 = arith.constant 0 : i32
    %c0_i32_0 = arith.constant 0 : i32
    %c0_i32_1 = arith.constant 0 : i32
    return %c0_i32, %c0_i32_0 : i32, i32
  }
  func.func @transform_4(%arg0: i32) -> (i32, i32) {
    %c0_i32 = arith.constant 0 : i32
    %c0_i32_0 = arith.constant 0 : i32
    %c0_i32_1 = arith.constant 0 : i32
    return %c0_i32, %c0_i32_0 : i32, i32
  }
  func.func @transform_5(%arg0: i32) -> (i32, i32) {
    %c0_i32 = arith.constant 0 : i32
    %c0_i32_0 = arith.constant 0 : i32
    %c0_i32_1 = arith.constant 0 : i32
    return %c0_i32, %c0_i32_0 : i32, i32
  }
  func.func @transform_6(%arg0: i32) -> (i32, i32) {
    %c0_i32 = arith.constant 0 : i32
    %c0_i32_0 = arith.constant 0 : i32
    %c0_i32_1 = arith.constant 0 : i32
    return %c0_i32, %c0_i32_0 : i32, i32
  }
  func.func @transform_7(%arg0: i32) -> (i32, i32) {
    %c0_i32 = arith.constant 0 : i32
    %c0_i32_0 = arith.constant 0 : i32
    %c0_i32_1 = arith.constant 0 : i32
    return %c0_i32, %c0_i32_0 : i32, i32
  }
  func.func @transform_8(%arg0: i32) -> (i32, i32) {
    %c0_i32 = arith.constant 0 : i32
    %c0_i32_0 = arith.constant 0 : i32
    %c0_i32_1 = arith.constant 0 : i32
    return %c0_i32, %c0_i32_0 : i32, i32
  }
  func.func @transform_9(%arg0: i32) -> (i32, i32) {
    %c0_i32 = arith.constant 0 : i32
    %c0_i32_0 = arith.constant 0 : i32
    return %c0_i32, %arg0 : i32, i32
  }
}

</mosaic_0001>

<llo_original>
// kernel: tpu_custom_call.1
$region0: #{tpu_custom_call.1}
  #allocation0 [shape = 'u32[]', space=smem, size = 0x4, offset = 0x4, fixed_abs, tag = 'smem constant byte address 0x4 - core index']
  #allocation1 [shape = 'u32[144,128]{1,0:T(1,128)}', space=vmem, size = 0x12000, scoped, tag = 'internal scratch']
  %s0 = inlined_call_operand.hbm [shape: f32[8,32], index: 0, kind: input, shape index: {}]
  %s1 = inlined_call_operand.hbm [shape: f32[8,32], index: 1, kind: input, shape index: {}]
  %s2 = inlined_call_operand.hbm [shape: bf16[32,512], index: 2, kind: input, shape index: {}]
  %s3 = inlined_call_operand.vmem [shape: f32[1,512], index: 3, kind: input, shape index: {}]
  %s4 = inlined_call_operand.hbm [shape: bf16[512,256], index: 4, kind: input, shape index: {}]
  %s5 = inlined_call_operand.vmem [shape: f32[1,256], index: 5, kind: input, shape index: {}]
  %s6 = inlined_call_operand.hbm [shape: bf16[256,128], index: 6, kind: input, shape index: {}]
  %s7 = inlined_call_operand.vmem [shape: f32[1,128], index: 7, kind: input, shape index: {}]
  %s8 = inlined_call_operand.vmem [shape: f32[1,128], index: 8, kind: input, shape index: {}]
  %s9 = inlined_call_operand.hbm [shape: f32[1,8], index: 9, kind: output, shape index: {}]
  %s10 = sld [smem:[#allocation0]]
  $region66: #{tpu_custom_call.1} parent=0
    _
  %s12 = ssub.s32 1, %s10
  %s13 = scalar_select 0, %s12, %s10
  $region1: #{tpu_custom_call.1} parent=0
    #allocation2 [shape = 'u8[4096]{0}', space=vmem, size = 0x1000, scoped, tag = 'input window, operand 0, single buffered']
    #allocation3 [shape = 's32[1]{0}', space=sflag, size = 0x4, scoped, tag = 'scoped memory for tpu_custom_call.1']
    #allocation4 [shape = 's32[1]{0}', space=sflag, size = 0x4, scoped, tag = 'scoped memory for tpu_custom_call.1']
    #allocation5 [shape = 'u8[4096]{0}', space=vmem, size = 0x1000, scoped, tag = 'input window, operand 1, single buffered']
    #allocation6 [shape = 's32[1]{0}', space=sflag, size = 0x4, scoped, tag = 'scoped memory for tpu_custom_call.1']
    #allocation7 [shape = 'u8[32768]{0}', space=vmem, size = 0x8000, scoped, tag = 'input window, operand 2, single buffered']
    #allocation8 [shape = 'u8[262144]{0}', space=vmem, size = 0x40000, scoped, tag = 'input window, operand 4, single buffered']
    #allocation9 [shape = 's32[1]{0}', space=sflag, size = 0x4, scoped, tag = 'scoped memory for tpu_custom_call.1']
    #allocation10 [shape = 'u8[65536]{0}', space=vmem, size = 0x10000, scoped, tag = 'input window, operand 6, single buffered']
    #allocation11 [shape = 'u8[512]{0}', space=vmem, size = 0x400, scoped, tag = 'output window, operand 0, single buffered']
    %14 = vsyncpa [#allocation3], 0
    %15 = vsyncpa [#allocation6], 0
    %16 = vsyncpa [#allocation9], 0
    %17 = vsyncpa [#allocation4], 0
    // Predicated region
    $region2: #{tpu_custom_call.1} parent=1 // pred_check
      _
    $region3: #{tpu_custom_call.1} parent=1 // pred_check_branch
      %19 = sbr.rel (0) target = $region5
    $region4: #{tpu_custom_call.1} parent=1 // pred_region
      %s21 = ssub.s32 128, 128
      %22 = vsyncadd [#allocation3], %s21
      %s24 = sshll.u32 [#allocation2], 4
      %s25 = int_to_ptr.vmem [resolvable:$true] %s24
      %27 = dma.hbm_to_vmem [thread:$0]  %s0, 128, %s25, [#allocation3]
    $region5: #{tpu_custom_call.1} parent=1 // pred_fallthru
      _
    // Predicated region
    $region6: #{tpu_custom_call.1} parent=1 // pred_check
      _
    $region7: #{tpu_custom_call.1} parent=1 // pred_check_branch
      %29 = sbr.rel (0) target = $region9
    $region8: #{tpu_custom_call.1} parent=1 // pred_region
      %s31 = ssub.s32 128, 128
      %32 = vsyncadd [#allocation6], %s31
      %s34 = sshll.u32 [#allocation5], 4
      %s35 = int_to_ptr.vmem [resolvable:$true] %s34
      %37 = dma.hbm_to_vmem [thread:$0]  %s1, 128, %s35, [#allocation6]
    $region9: #{tpu_custom_call.1} parent=1 // pred_fallthru
      _
    // Predicated region
    $region10: #{tpu_custom_call.1} parent=1 // pred_check
      _
    $region11: #{tpu_custom_call.1} parent=1 // pred_check_branch
      %39 = sbr.rel (0) target = $region13
    $region12: #{tpu_custom_call.1} parent=1 // pred_region
      %s41 = ssub.s32 1024, 1024
      %42 = vsyncadd [#allocation6], %s41
      %s43 = sshll.u32 [#allocation7], 4
      %s44 = int_to_ptr.vmem [resolvable:$true] %s43
      %49 = dma.hbm_to_vmem [thread:$0]  %s2, 1024, %s44, [#allocation6], 256, 256, 16
    $region13: #{tpu_custom_call.1} parent=1 // pred_fallthru
      _
    // Predicated region
    $region14: #{tpu_custom_call.1} parent=1 // pred_check
      _
    $region15: #{tpu_custom_call.1} parent=1 // pred_check_branch
      %51 = sbr.rel (0) target = $region17
    $region16: #{tpu_custom_call.1} parent=1 // pred_region
      _
    $region17: #{tpu_custom_call.1} parent=1 // pred_fallthru
      _
    // Predicated region
    $region18: #{tpu_custom_call.1} parent=1 // pred_check
      _
    $region19: #{tpu_custom_call.1} parent=1 // pred_check_branch
      %53 = sbr.rel (0) target = $region21
    $region20: #{tpu_custom_call.1} parent=1 // pred_region
      %s55 = ssub.s32 8192, 8192
      %56 = vsyncadd [#allocation9], %s55
      %s57 = sshll.u32 [#allocation8], 4
      %s58 = int_to_ptr.vmem [resolvable:$true] %s57
      %63 = dma.hbm_to_vmem [thread:$0]  %s4, 8192, %s58, [#allocation9], 128, 128, 8
    $region21: #{tpu_custom_call.1} parent=1 // pred_fallthru
      _
    // Predicated region
    $region22: #{tpu_custom_call.1} parent=1 // pred_check
      _
    $region23: #{tpu_custom_call.1} parent=1 // pred_check_branch
      %65 = sbr.rel (0) target = $region25
    $region24: #{tpu_custom_call.1} parent=1 // pred_region
      _
    $region25: #{tpu_custom_call.1} parent=1 // pred_fallthru
      _
    // Predicated region
    $region26: #{tpu_custom_call.1} parent=1 // pred_check
      _
    $region27: #{tpu_custom_call.1} parent=1 // pred_check_branch
      %67 = sbr.rel (0) target = $region29
    $region28: #{tpu_custom_call.1} parent=1 // pred_region
      %s69 = ssub.s32 2048, 2048
      %70 = vsyncadd [#allocation9], %s69
      %s71 = sshll.u32 [#allocation10], 4
      %s72 = int_to_ptr.vmem [resolvable:$true] %s71
      %77 = dma.hbm_to_vmem [thread:$0]  %s6, 2048, %s72, [#allocation9], 64, 64, 4
    $region29: #{tpu_custom_call.1} parent=1 // pred_fallthru
      _
    // Predicated region
    $region30: #{tpu_custom_call.1} parent=1 // pred_check
      _
    $region31: #{tpu_custom_call.1} parent=1 // pred_check_branch
      %79 = sbr.rel (0) target = $region33
    $region32: #{tpu_custom_call.1} parent=1 // pred_region
      _
    $region33: #{tpu_custom_call.1} parent=1 // pred_fallthru
      _
    // Predicated region
    $region34: #{tpu_custom_call.1} parent=1 // pred_check
      _
    $region35: #{tpu_custom_call.1} parent=1 // pred_check_branch
      %81 = sbr.rel (0) target = $region37
    $region36: #{tpu_custom_call.1} parent=1 // pred_region
      _
    $region37: #{tpu_custom_call.1} parent=1 // pred_fallthru
      _
    // Predicated region
    $region38: #{tpu_custom_call.1} parent=1 // pred_check
      _
    $region39: #{tpu_custom_call.1} parent=1 // pred_check_branch
      %83 = sbr.rel (0) target = $region41
    $region40: #{tpu_custom_call.1} parent=1 // pred_region
      %84 = dma.done [#allocation3], 128
    $region41: #{tpu_custom_call.1} parent=1 // pred_fallthru
      _
    // Predicated region
    $region42: #{tpu_custom_call.1} parent=1 // pred_check
      _
    $region43: #{tpu_custom_call.1} parent=1 // pred_check_branch
      %86 = sbr.rel (0) target = $region45
    $region44: #{tpu_custom_call.1} parent=1 // pred_region
      %87 = dma.done [#allocation6], 128
    $region45: #{tpu_custom_call.1} parent=1 // pred_fallthru
      _
    // Predicated region
    $region46: #{tpu_custom_call.1} parent=1 // pred_check
      _
    $region47: #{tpu_custom_call.1} parent=1 // pred_check_branch
      %89 = sbr.rel (0) target = $region49
    $region48: #{tpu_custom_call.1} parent=1 // pred_region
      %90 = dma.done [#allocation6], 1024
    $region49: #{tpu_custom_call.1} parent=1 // pred_fallthru
      _
    // Predicated region
    $region50: #{tpu_custom_call.1} parent=1 // pred_check
      _
    $region51: #{tpu_custom_call.1} parent=1 // pred_check_branch
      %92 = sbr.rel (0) target = $region53
    $region52: #{tpu_custom_call.1} parent=1 // pred_region
      %93 = dma.done [#allocation9], 8192
    $region53: #{tpu_custom_call.1} parent=1 // pred_fallthru
      _
    // Predicated region
    $region54: #{tpu_custom_call.1} parent=1 // pred_check
      _
    $region55: #{tpu_custom_call.1} parent=1 // pred_check_branch
      %95 = sbr.rel (0) target = $region57
    $region56: #{tpu_custom_call.1} parent=1 // pred_region
      %96 = dma.done [#allocation9], 2048
    $region57: #{tpu_custom_call.1} parent=1 // pred_fallthru
      _
    %v98 = vld [vmem:[#allocation2] sm:$0xff]
    %v99 = vpack.c.bf16 %v98, %v98
    %v100 = vld [vmem:[#allocation7] sm:$0xff]
    %v101 = vld [vmem:[#allocation7 + $0x8] sm:$0xff]
    %v102 = vld [vmem:[#allocation7 + $0x10] sm:$0xff]
    %v103 = vld [vmem:[#allocation7 + $0x18] sm:$0xff]
    %v104 = vld [vmem:[#allocation7 + $0x20] sm:$0xff]
    %v105 = vld [vmem:[#allocation7 + $0x28] sm:$0xff]
    %v106 = vld [vmem:[#allocation7 + $0x30] sm:$0xff]
    %v107 = vld [vmem:[#allocation7 + $0x38] sm:$0xff]
    %v108 = vld [vmem:[%s3] sm:$0xf]
    %v110 = vlaneseq
    %v111 = vshrl.u32 %v110, 7
    %v112 = vsub.s32 0, %v111
    %v113 = vrot.slane %v108, %v112
    %v114 = vlaneseq
    %v115 = vshrl.u32 %v114, 7
    %v116 = vsub.s32 1, %v115
    %v117 = vrot.slane %v108, %v116
    %v118 = vlaneseq
    %v119 = vshrl.u32 %v118, 7
    %v120 = vsub.s32 2, %v119
    %v121 = vrot.slane %v108, %v120
    %v122 = vlaneseq
    %v123 = vshrl.u32 %v122, 7
    %v124 = vsub.s32 3, %v123
    %v125 = vrot.slane %v108, %v124
    %v138 = vunpack.c.l.b16 %v100
    %v139 = vunpack.c.h.b16 %v100
    %v140 = vunpack.c.l.b16 %v101
    %v141 = vunpack.c.h.b16 %v101
    %v142 = vunpack.c.l.b16 %v102
    %v143 = vunpack.c.h.b16 %v102
    %v144 = vunpack.c.l.b16 %v103
    %v145 = vunpack.c.h.b16 %v103
    %v146 = vunpack.c.l.b16 %v104
    %v147 = vunpack.c.h.b16 %v104
    %v148 = vunpack.c.l.b16 %v105
    %v149 = vunpack.c.h.b16 %v105
    %v150 = vunpack.c.l.b16 %v106
    %v151 = vunpack.c.h.b16 %v106
    %v152 = vunpack.c.l.b16 %v107
    %v153 = vunpack.c.h.b16 %v107
    %v154 = vpack.c.b16 %v142, %v138
    %v155 = vpack.c.b16 %v143, %v139
    %v156 = vpack.c.b16 %v144, %v140
    %v157 = vpack.c.b16 %v145, %v141
    %v158 = vpack.c.b16 %v150, %v146
    %v159 = vpack.c.b16 %v151, %v147
    %v160 = vpack.c.b16 %v152, %v148
    %v161 = vpack.c.b16 %v153, %v149
    %vm170 = vcmask 261120
    %v172 = vsel %vm170, %v99, 0
    %174 = vmatprep.subr.bf16.mxu0 %v155
    %175 = vmatpush1.bf16.msra.mxu0 %v154
    %176 = vmatprep.subr.bf16.mxu0 %v159
    %177 = vmatpush1.bf16.msra.mxu0 %v158
    %178 = vmatprep.subr.bf16.mxu0 0
    %179 = vmatpush1.bf16.msra.mxu0 0
    %180 = vmatprep.subr.bf16.mxu0 0
    %181 = vmatpush1.bf16.msra.mxu0 0
    %182 = vmatprep.subr.bf16.mxu0 0
    %183 = vmatpush1.bf16.msra.mxu0 0
    %184 = vmatprep.subr.bf16.mxu0 0
    %185 = vmatpush1.bf16.msra.mxu0 0
    %186 = vmatprep.subr.bf16.mxu0 0
    %187 = vmatpush1.bf16.msra.mxu0 0
    %188 = vmatprep.subr.bf16.mxu0 0
    %189 = vmatpush1.bf16.msra.mxu0 0
    %190 = vmatprep.subr.bf16.mxu0 0
    %191 = vmatpush1.bf16.msra.mxu0 0
    %192 = vmatprep.subr.bf16.mxu0 0
    %193 = vmatpush1.bf16.msra.mxu0 0
    %194 = vmatprep.subr.bf16.mxu0 0
    %195 = vmatpush1.bf16.msra.mxu0 0
    %196 = vmatprep.subr.bf16.mxu0 0
    %197 = vmatpush1.bf16.msra.mxu0 0
    %198 = vmatprep.subr.bf16.mxu0 0
    %199 = vmatpush1.bf16.msra.mxu0 0
    %200 = vmatprep.subr.bf16.mxu0 0
    %201 = vmatpush1.bf16.msra.mxu0 0
    %202 = vmatprep.subr.bf16.mxu0 0
    %203 = vmatpush1.bf16.msra.mxu0 0
    %204 = vmatprep.subr.bf16.mxu0 0
    %205 = vmatpush1.bf16.msra.mxu0 0
    %206 = vmatprep.mubr.bf16.mxu0 0
    %207 = vmatmul.mubr.bf16.gmra.mrb[0].mxu0 %v172
    %v208 = vpop.f32.mrb[0].mxu0
    %v209 = vadd.f32 %v113, %v208
    %v210 = vpop.f32.mrb[0].mxu0
    %v211 = vadd.f32 %v117, %v210
    %v212 = vpop.f32.mrb[0].mxu0
    %v213 = vpop.f32.mrb[0].mxu0
    %214 = vdwg.mxu0
    %215 = vmatprep.subr.bf16.mxu0 %v157
    %216 = vmatpush1.bf16.msra.mxu0 %v156
    %217 = vmatprep.subr.bf16.mxu0 %v161
    %218 = vmatpush1.bf16.msra.mxu0 %v160
    %219 = vmatprep.subr.bf16.mxu0 0
    %220 = vmatpush1.bf16.msra.mxu0 0
    %221 = vmatprep.subr.bf16.mxu0 0
    %222 = vmatpush1.bf16.msra.mxu0 0
    %223 = vmatprep.subr.bf16.mxu0 0
    %224 = vmatpush1.bf16.msra.mxu0 0
    %225 = vmatprep.subr.bf16.mxu0 0
    %226 = vmatpush1.bf16.msra.mxu0 0
    %227 = vmatprep.subr.bf16.mxu0 0
    %228 = vmatpush1.bf16.msra.mxu0 0
    %229 = vmatprep.subr.bf16.mxu0 0
    %230 = vmatpush1.bf16.msra.mxu0 0
    %231 = vmatprep.subr.bf16.mxu0 0
    %232 = vmatpush1.bf16.msra.mxu0 0
    %233 = vmatprep.subr.bf16.mxu0 0
    %234 = vmatpush1.bf16.msra.mxu0 0
    %235 = vmatprep.subr.bf16.mxu0 0
    %236 = vmatpush1.bf16.msra.mxu0 0
    %237 = vmatprep.subr.bf16.mxu0 0
    %238 = vmatpush1.bf16.msra.mxu0 0
    %239 = vmatprep.subr.bf16.mxu0 0
    %240 = vmatpush1.bf16.msra.mxu0 0
    %241 = vmatprep.subr.bf16.mxu0 0
    %242 = vmatpush1.bf16.msra.mxu0 0
    %243 = vmatprep.subr.bf16.mxu0 0
    %244 = vmatpush1.bf16.msra.mxu0 0
    %245 = vmatprep.subr.bf16.mxu0 0
    %246 = vmatpush1.bf16.msra.mxu0 0
    %247 = vmatprep.mubr.bf16.mxu0 0
    %248 = vmatmul.mubr.bf16.gmra.mrb[0].mxu0 %v172
    %v249 = vpop.f32.mrb[0].mxu0
    %v250 = vadd.f32 %v121, %v249
    %v251 = vpop.f32.mrb[0].mxu0
    %v252 = vadd.f32 %v125, %v251
    %v253 = vpop.f32.mrb[0].mxu0
    %v254 = vpop.f32.mrb[0].mxu0
    %255 = vdwg.mxu0
    %v256 = vmax.f32 %v209, 0.0
    %v257 = vmax.f32 %v211, 0.0
    %v258 = vmax.f32 %v250, 0.0
    %v259 = vmax.f32 %v252, 0.0
    %v260 = vpack.c.bf16 %v256, %v256
    %v261 = vpack.c.bf16 %v257, %v257
    %v262 = vpack.c.bf16 %v258, %v258
    %v263 = vpack.c.bf16 %v259, %v259
    %v264 = vld [vmem:[#allocation8] sm:$0xff]
    %v265 = vld [vmem:[#allocation8 + $0x8] sm:$0xff]
    %v266 = vld [vmem:[#allocation8 + $0x10] sm:$0xff]
    %v267 = vld [vmem:[#allocation8 + $0x18] sm:$0xff]
    %v268 = vld [vmem:[#allocation8 + $0x20] sm:$0xff]
    %v269 = vld [vmem:[#allocation8 + $0x28] sm:$0xff]
    %v270 = vld [vmem:[#allocation8 + $0x30] sm:$0xff]
    %v271 = vld [vmem:[#allocation8 + $0x38] sm:$0xff]
    %v272 = vld [vmem:[#allocation8 + $0x40] sm:$0xff]
    %v273 = vld [vmem:[#allocation8 + $0x48] sm:$0xff]
    %v274 = vld [vmem:[#allocation8 + $0x50] sm:$0xff]
    %v275 = vld [vmem:[#allocation8 + $0x58] sm:$0xff]
    %v276 = vld [vmem:[#allocation8 + $0x60] sm:$0xff]
    %v277 = vld [vmem:[#allocation8 + $0x68] sm:$0xff]
    %v278 = vld [vmem:[#allocation8 + $0x70] sm:$0xff]
    %v279 = vld [vmem:[#allocation8 + $0x78] sm:$0xff]
    %v280 = vld [vmem:[#allocation8 + $0x80] sm:$0xff]
    %v281 = vld [vmem:[#allocation8 + $0x88] sm:$0xff]
    %v282 = vld [vmem:[#allocation8 + $0x90] sm:$0xff]
    %v283 = vld [vmem:[#allocation8 + $0x98] sm:$0xff]
    %v284 = vld [vmem:[#allocation8 + $0xa0] sm:$0xff]
    %v285 = vld [vmem:[#allocation8 + $0xa8] sm:$0xff]
    %v286 = vld [vmem:[#allocation8 + $0xb0] sm:$0xff]
    %v287 = vld [vmem:[#allocation8 + $0xb8] sm:$0xff]
    %v288 = vld [vmem:[#allocation8 + $0xc0] sm:$0xff]
    %v289 = vld [vmem:[#allocation8 + $0xc8] sm:$0xff]
    %v290 = vld [vmem:[#allocation8 + $0xd0] sm:$0xff]
    %v291 = vld [vmem:[#allocation8 + $0xd8] sm:$0xff]
    %v292 = vld [vmem:[#allocation8 + $0xe0] sm:$0xff]
    %v293 = vld [vmem:[#allocation8 + $0xe8] sm:$0xff]
    %v294 = vld [vmem:[#allocation8 + $0xf0] sm:$0xff]
    %v295 = vld [vmem:[#allocation8 + $0xf8] sm:$0xff]
    %v296 = vld [vmem:[#allocation8 + $0x100] sm:$0xff]
    %v297 = vld [vmem:[#allocation8 + $0x108] sm:$0xff]
    %v298 = vld [vmem:[#allocation8 + $0x110] sm:$0xff]
    %v299 = vld [vmem:[#allocation8 + $0x118] sm:$0xff]
    %v300 = vld [vmem:[#allocation8 + $0x120] sm:$0xff]
    %v301 = vld [vmem:[#allocation8 + $0x128] sm:$0xff]
    %v302 = vld [vmem:[#allocation8 + $0x130] sm:$0xff]
    %v303 = vld [vmem:[#allocation8 + $0x138] sm:$0xff]
    %v304 = vld [vmem:[#allocation8 + $0x140] sm:$0xff]
    %v305 = vld [vmem:[#allocation8 + $0x148] sm:$0xff]
    %v306 = vld [vmem:[#allocation8 + $0x150] sm:$0xff]
    %v307 = vld [vmem:[#allocation8 + $0x158] sm:$0xff]
    %v308 = vld [vmem:[#allocation8 + $0x160] sm:$0xff]
    %v309 = vld [vmem:[#allocation8 + $0x168] sm:$0xff]
    %v310 = vld [vmem:[#allocation8 + $0x170] sm:$0xff]
    %v311 = vld [vmem:[#allocation8 + $0x178] sm:$0xff]
    %v312 = vld [vmem:[#allocation8 + $0x180] sm:$0xff]
    %v313 = vld [vmem:[#allocation8 + $0x188] sm:$0xff]
    %v314 = vld [vmem:[#allocation8 + $0x190] sm:$0xff]
    %v315 = vld [vmem:[#allocation8 + $0x198] sm:$0xff]
    %v316 = vld [vmem:[#allocation8 + $0x1a0] sm:$0xff]
    %v317 = vld [vmem:[#allocation8 + $0x1a8] sm:$0xff]
    %v318 = vld [vmem:[#allocation8 + $0x1b0] sm:$0xff]
    %v319 = vld [vmem:[#allocation8 + $0x1b8] sm:$0xff]
    %v320 = vld [vmem:[#allocation8 + $0x1c0] sm:$0xff]
    %v321 = vld [vmem:[#allocation8 + $0x1c8] sm:$0xff]
    %v322 = vld [vmem:[#allocation8 + $0x1d0] sm:$0xff]
    %v323 = vld [vmem:[#allocation8 + $0x1d8] sm:$0xff]
    %v324 = vld [vmem:[#allocation8 + $0x1e0] sm:$0xff]
    %v325 = vld [vmem:[#allocation8 + $0x1e8] sm:$0xff]
    %v326 = vld [vmem:[#allocation8 + $0x1f0] sm:$0xff]
    %v327 = vld [vmem:[#allocation8 + $0x1f8] sm:$0xff]
    %v328 = vld [vmem:[%s5] sm:$0x3]
    %v330 = vlaneseq
    %v331 = vshrl.u32 %v330, 7
    %v332 = vsub.s32 0, %v331
    %v333 = vrot.slane %v328, %v332
    %v334 = vlaneseq
    %v335 = vshrl.u32 %v334, 7
    %v336 = vsub.s32 1, %v335
    %v337 = vrot.slane %v328, %v336
    %v404 = vunpack.c.l.b16 %v264
    %v405 = vunpack.c.h.b16 %v264
    %v406 = vunpack.c.l.b16 %v265
    %v407 = vunpack.c.h.b16 %v265
    %v408 = vunpack.c.l.b16 %v266
    %v409 = vunpack.c.h.b16 %v266
    %v410 = vunpack.c.l.b16 %v267
    %v411 = vunpack.c.h.b16 %v267
    %v412 = vunpack.c.l.b16 %v268
    %v413 = vunpack.c.h.b16 %v268
    %v414 = vunpack.c.l.b16 %v269
    %v415 = vunpack.c.h.b16 %v269
    %v416 = vunpack.c.l.b16 %v270
    %v417 = vunpack.c.h.b16 %v270
    %v418 = vunpack.c.l.b16 %v271
    %v419 = vunpack.c.h.b16 %v271
    %v420 = vunpack.c.l.b16 %v272
    %v421 = vunpack.c.h.b16 %v272
    %v422 = vunpack.c.l.b16 %v273
    %v423 = vunpack.c.h.b16 %v273
    %v424 = vunpack.c.l.b16 %v274
    %v425 = vunpack.c.h.b16 %v274
    %v426 = vunpack.c.l.b16 %v275
    %v427 = vunpack.c.h.b16 %v275
    %v428 = vunpack.c.l.b16 %v276
    %v429 = vunpack.c.h.b16 %v276
    %v430 = vunpack.c.l.b16 %v277
    %v431 = vunpack.c.h.b16 %v277
    %v432 = vunpack.c.l.b16 %v278
    %v433 = vunpack.c.h.b16 %v278
    %v434 = vunpack.c.l.b16 %v279
    %v435 = vunpack.c.h.b16 %v279
    %v436 = vunpack.c.l.b16 %v280
    %v437 = vunpack.c.h.b16 %v280
    %v438 = vunpack.c.l.b16 %v281
    %v439 = vunpack.c.h.b16 %v281
    %v440 = vunpack.c.l.b16 %v282
    %v441 = vunpack.c.h.b16 %v282
    %v442 = vunpack.c.l.b16 %v283
    %v443 = vunpack.c.h.b16 %v283
    %v444 = vunpack.c.l.b16 %v284
    %v445 = vunpack.c.h.b16 %v284
    %v446 = vunpack.c.l.b16 %v285
    %v447 = vunpack.c.h.b16 %v285
    %v448 = vunpack.c.l.b16 %v286
    %v449 = vunpack.c.h.b16 %v286
    %v450 = vunpack.c.l.b16 %v287
    %v451 = vunpack.c.h.b16 %v287
    %v452 = vunpack.c.l.b16 %v288
    %v453 = vunpack.c.h.b16 %v288
    %v454 = vunpack.c.l.b16 %v289
    %v455 = vunpack.c.h.b16 %v289
    %v456 = vunpack.c.l.b16 %v290
    %v457 = vunpack.c.h.b16 %v290
    %v458 = vunpack.c.l.b16 %v291
    %v459 = vunpack.c.h.b16 %v291
    %v460 = vunpack.c.l.b16 %v292
    %v461 = vunpack.c.h.b16 %v292
    %v462 = vunpack.c.l.b16 %v293
    %v463 = vunpack.c.h.b16 %v293
    %v464 = vunpack.c.l.b16 %v294
    %v465 = vunpack.c.h.b16 %v294
    %v466 = vunpack.c.l.b16 %v295
    %v467 = vunpack.c.h.b16 %v295
    %v468 = vunpack.c.l.b16 %v296
    %v469 = vunpack.c.h.b16 %v296
    %v470 = vunpack.c.l.b16 %v297
    %v471 = vunpack.c.h.b16 %v297
    %v472 = vunpack.c.l.b16 %v298
    %v473 = vunpack.c.h.b16 %v298
    %v474 = vunpack.c.l.b16 %v299
    %v475 = vunpack.c.h.b16 %v299
    %v476 = vunpack.c.l.b16 %v300
    %v477 = vunpack.c.h.b16 %v300
    %v478 = vunpack.c.l.b16 %v301
    %v479 = vunpack.c.h.b16 %v301
    %v480 = vunpack.c.l.b16 %v302
    %v481 = vunpack.c.h.b16 %v302
    %v482 = vunpack.c.l.b16 %v303
    %v483 = vunpack.c.h.b16 %v303
    %v484 = vunpack.c.l.b16 %v304
    %v485 = vunpack.c.h.b16 %v304
    %v486 = vunpack.c.l.b16 %v305
    %v487 = vunpack.c.h.b16 %v305
    %v488 = vunpack.c.l.b16 %v306
    %v489 = vunpack.c.h.b16 %v306
    %v490 = vunpack.c.l.b16 %v307
    %v491 = vunpack.c.h.b16 %v307
    %v492 = vunpack.c.l.b16 %v308
    %v493 = vunpack.c.h.b16 %v308
    %v494 = vunpack.c.l.b16 %v309
    %v495 = vunpack.c.h.b16 %v309
    %v496 = vunpack.c.l.b16 %v310
    %v497 = vunpack.c.h.b16 %v310
    %v498 = vunpack.c.l.b16 %v311
    %v499 = vunpack.c.h.b16 %v311
    %v500 = vunpack.c.l.b16 %v312
    %v501 = vunpack.c.h.b16 %v312
    %v502 = vunpack.c.l.b16 %v313
    %v503 = vunpack.c.h.b16 %v313
    %v504 = vunpack.c.l.b16 %v314
    %v505 = vunpack.c.h.b16 %v314
    %v506 = vunpack.c.l.b16 %v315
    %v507 = vunpack.c.h.b16 %v315
    %v508 = vunpack.c.l.b16 %v316
    %v509 = vunpack.c.h.b16 %v316
    %v510 = vunpack.c.l.b16 %v317
    %v511 = vunpack.c.h.b16 %v317
    %v512 = vunpack.c.l.b16 %v318
    %v513 = vunpack.c.h.b16 %v318
    %v514 = vunpack.c.l.b16 %v319
    %v515 = vunpack.c.h.b16 %v319
    %v516 = vunpack.c.l.b16 %v320
    %v517 = vunpack.c.h.b16 %v320
    %v518 = vunpack.c.l.b16 %v321
    %v519 = vunpack.c.h.b16 %v321
    %v520 = vunpack.c.l.b16 %v322
    %v521 = vunpack.c.h.b16 %v322
    %v522 = vunpack.c.l.b16 %v323
    %v523 = vunpack.c.h.b16 %v323
    %v524 = vunpack.c.l.b16 %v324
    %v525 = vunpack.c.h.b16 %v324
    %v526 = vunpack.c.l.b16 %v325
    %v527 = vunpack.c.h.b16 %v325
    %v528 = vunpack.c.l.b16 %v326
    %v529 = vunpack.c.h.b16 %v326
    %v530 = vunpack.c.l.b16 %v327
    %v531 = vunpack.c.h.b16 %v327
    %v532 = vpack.c.b16 %v406, %v404
    %v533 = vpack.c.b16 %v407, %v405
    %v534 = vpack.c.b16 %v410, %v408
    %v535 = vpack.c.b16 %v411, %v409
    %v536 = vpack.c.b16 %v414, %v412
    %v537 = vpack.c.b16 %v415, %v413
    %v538 = vpack.c.b16 %v418, %v416
    %v539 = vpack.c.b16 %v419, %v417
    %v540 = vpack.c.b16 %v422, %v420
    %v541 = vpack.c.b16 %v423, %v421
    %v542 = vpack.c.b16 %v426, %v424
    %v543 = vpack.c.b16 %v427, %v425
    %v544 = vpack.c.b16 %v430, %v428
    %v545 = vpack.c.b16 %v431, %v429
    %v546 = vpack.c.b16 %v434, %v432
    %v547 = vpack.c.b16 %v435, %v433
    %v548 = vpack.c.b16 %v438, %v436
    %v549 = vpack.c.b16 %v439, %v437
    %v550 = vpack.c.b16 %v442, %v440
    %v551 = vpack.c.b16 %v443, %v441
    %v552 = vpack.c.b16 %v446, %v444
    %v553 = vpack.c.b16 %v447, %v445
    %v554 = vpack.c.b16 %v450, %v448
    %v555 = vpack.c.b16 %v451, %v449
    %v556 = vpack.c.b16 %v454, %v452
    %v557 = vpack.c.b16 %v455, %v453
    %v558 = vpack.c.b16 %v458, %v456
    %v559 = vpack.c.b16 %v459, %v457
    %v560 = vpack.c.b16 %v462, %v460
    %v561 = vpack.c.b16 %v463, %v461
    %v562 = vpack.c.b16 %v466, %v464
    %v563 = vpack.c.b16 %v467, %v465
    %v564 = vpack.c.b16 %v470, %v468
    %v565 = vpack.c.b16 %v471, %v469
    %v566 = vpack.c.b16 %v474, %v472
    %v567 = vpack.c.b16 %v475, %v473
    %v568 = vpack.c.b16 %v478, %v476
    %v569 = vpack.c.b16 %v479, %v477
    %v570 = vpack.c.b16 %v482, %v480
    %v571 = vpack.c.b16 %v483, %v481
    %v572 = vpack.c.b16 %v486, %v484
    %v573 = vpack.c.b16 %v487, %v485
    %v574 = vpack.c.b16 %v490, %v488
    %v575 = vpack.c.b16 %v491, %v489
    %v576 = vpack.c.b16 %v494, %v492
    %v577 = vpack.c.b16 %v495, %v493
    %v578 = vpack.c.b16 %v498, %v496
    %v579 = vpack.c.b16 %v499, %v497
    %v580 = vpack.c.b16 %v502, %v500
    %v581 = vpack.c.b16 %v503, %v501
    %v582 = vpack.c.b16 %v506, %v504
    %v583 = vpack.c.b16 %v507, %v505
    %v584 = vpack.c.b16 %v510, %v508
    %v585 = vpack.c.b16 %v511, %v509
    %v586 = vpack.c.b16 %v514, %v512
    %v587 = vpack.c.b16 %v515, %v513
    %v588 = vpack.c.b16 %v518, %v516
    %v589 = vpack.c.b16 %v519, %v517
    %v590 = vpack.c.b16 %v522, %v520
    %v591 = vpack.c.b16 %v523, %v521
    %v592 = vpack.c.b16 %v526, %v524
    %v593 = vpack.c.b16 %v527, %v525
    %v594 = vpack.c.b16 %v530, %v528
    %v595 = vpack.c.b16 %v531, %v529
    %660 = vmatprep.subr.bf16.mxu0 %v533
    %661 = vmatpush1.bf16.msra.mxu0 %v532
    %662 = vmatprep.subr.bf16.mxu0 %v535
    %663 = vmatpush1.bf16.msra.mxu0 %v534
    %664 = vmatprep.subr.bf16.mxu0 %v537
    %665 = vmatpush1.bf16.msra.mxu0 %v536
    %666 = vmatprep.subr.bf16.mxu0 %v539
    %667 = vmatpush1.bf16.msra.mxu0 %v538
    %668 = vmatprep.subr.bf16.mxu0 %v541
    %669 = vmatpush1.bf16.msra.mxu0 %v540
    %670 = vmatprep.subr.bf16.mxu0 %v543
    %671 = vmatpush1.bf16.msra.mxu0 %v542
    %672 = vmatprep.subr.bf16.mxu0 %v545
    %673 = vmatpush1.bf16.msra.mxu0 %v544
    %674 = vmatprep.subr.bf16.mxu0 %v547
    %675 = vmatpush1.bf16.msra.mxu0 %v546
    %676 = vmatprep.subr.bf16.mxu0 %v549
    %677 = vmatpush1.bf16.msra.mxu0 %v548
    %678 = vmatprep.subr.bf16.mxu0 %v551
    %679 = vmatpush1.bf16.msra.mxu0 %v550
    %680 = vmatprep.subr.bf16.mxu0 %v553
    %681 = vmatpush1.bf16.msra.mxu0 %v552
    %682 = vmatprep.subr.bf16.mxu0 %v555
    %683 = vmatpush1.bf16.msra.mxu0 %v554
    %684 = vmatprep.subr.bf16.mxu0 %v557
    %685 = vmatpush1.bf16.msra.mxu0 %v556
    %686 = vmatprep.subr.bf16.mxu0 %v559
    %687 = vmatpush1.bf16.msra.mxu0 %v558
    %688 = vmatprep.subr.bf16.mxu0 %v561
    %689 = vmatpush1.bf16.msra.mxu0 %v560
    %690 = vmatprep.subr.bf16.mxu0 %v563
    %691 = vmatpush1.bf16.msra.mxu0 %v562
    %692 = vmatprep.mubr.bf16.mxu0 %v261
    %693 = vmatmul.mubr.bf16.gmra.mrb[0].mxu0 %v260
    %v694 = vpop.f32.mrb[0].mxu0
    %v695 = vadd.f32 %v333, %v694
    %v696 = vpop.f32.mrb[0].mxu0
    %v697 = vadd.f32 %v337, %v696
    %v698 = vpop.f32.mrb[0].mxu0
    %v699 = vpop.f32.mrb[0].mxu0
    %700 = vdwg.mxu0
    %701 = vmatprep.subr.bf16.mxu0 %v565
    %702 = vmatpush1.bf16.msra.mxu0 %v564
    %703 = vmatprep.subr.bf16.mxu0 %v567
    %704 = vmatpush1.bf16.msra.mxu0 %v566
    %705 = vmatprep.subr.bf16.mxu0 %v569
    %706 = vmatpush1.bf16.msra.mxu0 %v568
    %707 = vmatprep.subr.bf16.mxu0 %v571
    %708 = vmatpush1.bf16.msra.mxu0 %v570
    %709 = vmatprep.subr.bf16.mxu0 %v573
    %710 = vmatpush1.bf16.msra.mxu0 %v572
    %711 = vmatprep.subr.bf16.mxu0 %v575
    %712 = vmatpush1.bf16.msra.mxu0 %v574
    %713 = vmatprep.subr.bf16.mxu0 %v577
    %714 = vmatpush1.bf16.msra.mxu0 %v576
    %715 = vmatprep.subr.bf16.mxu0 %v579
    %716 = vmatpush1.bf16.msra.mxu0 %v578
    %717 = vmatprep.subr.bf16.mxu0 %v581
    %718 = vmatpush1.bf16.msra.mxu0 %v580
    %719 = vmatprep.subr.bf16.mxu0 %v583
    %720 = vmatpush1.bf16.msra.mxu0 %v582
    %721 = vmatprep.subr.bf16.mxu0 %v585
    %722 = vmatpush1.bf16.msra.mxu0 %v584
    %723 = vmatprep.subr.bf16.mxu0 %v587
    %724 = vmatpush1.bf16.msra.mxu0 %v586
    %725 = vmatprep.subr.bf16.mxu0 %v589
    %726 = vmatpush1.bf16.msra.mxu0 %v588
    %727 = vmatprep.subr.bf16.mxu0 %v591
    %728 = vmatpush1.bf16.msra.mxu0 %v590
    %729 = vmatprep.subr.bf16.mxu0 %v593
    %730 = vmatpush1.bf16.msra.mxu0 %v592
    %731 = vmatprep.subr.bf16.mxu0 %v595
    %732 = vmatpush1.bf16.msra.mxu0 %v594
    %733 = vmatprep.mubr.bf16.mxu0 %v263
    %734 = vmatmul.mubr.bf16.gmra.mrb[0].mxu0 %v262
    %v735 = vpop.f32.mrb[0].mxu0
    %v736 = vadd.f32 %v695, %v735
    %v737 = vpop.f32.mrb[0].mxu0
    %v738 = vadd.f32 %v697, %v737
    %v739 = vpop.f32.mrb[0].mxu0
    %v740 = vpop.f32.mrb[0].mxu0
    %741 = vdwg.mxu0
    %v742 = vmax.f32 %v736, 0.0
    %v743 = vmax.f32 %v738, 0.0
    %v744 = vpack.c.bf16 %v742, %v742
    %v745 = vpack.c.bf16 %v743, %v743
    %v746 = vld [vmem:[#allocation10] sm:$0xf]
    %v747 = vld [vmem:[#allocation10 + $0x4] sm:$0xf]
    %v748 = vld [vmem:[#allocation10 + $0x8] sm:$0xf]
    %v749 = vld [vmem:[#allocation10 + $0xc] sm:$0xf]
    %v750 = vld [vmem:[#allocation10 + $0x10] sm:$0xf]
    %v751 = vld [vmem:[#allocation10 + $0x14] sm:$0xf]
    %v752 = vld [vmem:[#allocation10 + $0x18] sm:$0xf]
    %v753 = vld [vmem:[#allocation10 + $0x1c] sm:$0xf]
    %v754 = vld [vmem:[#allocation10 + $0x20] sm:$0xf]
    %v755 = vld [vmem:[#allocation10 + $0x24] sm:$0xf]
    %v756 = vld [vmem:[#allocation10 + $0x28] sm:$0xf]
    %v757 = vld [vmem:[#allocation10 + $0x2c] sm:$0xf]
    %v758 = vld [vmem:[#allocation10 + $0x30] sm:$0xf]
    %v759 = vld [vmem:[#allocation10 + $0x34] sm:$0xf]
    %v760 = vld [vmem:[#allocation10 + $0x38] sm:$0xf]
    %v761 = vld [vmem:[#allocation10 + $0x3c] sm:$0xf]
    %v762 = vld [vmem:[#allocation10 + $0x40] sm:$0xf]
    %v763 = vld [vmem:[#allocation10 + $0x44] sm:$0xf]
    %v764 = vld [vmem:[#allocation10 + $0x48] sm:$0xf]
    %v765 = vld [vmem:[#allocation10 + $0x4c] sm:$0xf]
    %v766 = vld [vmem:[#allocation10 + $0x50] sm:$0xf]
    %v767 = vld [vmem:[#allocation10 + $0x54] sm:$0xf]
    %v768 = vld [vmem:[#allocation10 + $0x58] sm:$0xf]
    %v769 = vld [vmem:[#allocation10 + $0x5c] sm:$0xf]
    %v770 = vld [vmem:[#allocation10 + $0x60] sm:$0xf]
    %v771 = vld [vmem:[#allocation10 + $0x64] sm:$0xf]
    %v772 = vld [vmem:[#allocation10 + $0x68] sm:$0xf]
    %v773 = vld [vmem:[#allocation10 + $0x6c] sm:$0xf]
    %v774 = vld [vmem:[#allocation10 + $0x70] sm:$0xf]
    %v775 = vld [vmem:[#allocation10 + $0x74] sm:$0xf]
    %v776 = vld [vmem:[#allocation10 + $0x78] sm:$0xf]
    %v777 = vld [vmem:[#allocation10 + $0x7c] sm:$0xf]
    %v778 = vld [vmem:[%s7] sm:$0x1]
    %v780 = vlaneseq
    %v781 = vshrl.u32 %v780, 7
    %v782 = vsub.s32 0, %v781
    %v783 = vrot.slane %v778, %v782
    %v817 = vunpack.c.l.b16 %v746
    %v818 = vunpack.c.l.b16 %v747
    %v819 = vunpack.c.l.b16 %v748
    %v820 = vunpack.c.l.b16 %v749
    %v821 = vunpack.c.l.b16 %v750
    %v822 = vunpack.c.l.b16 %v751
    %v823 = vunpack.c.l.b16 %v752
    %v824 = vunpack.c.l.b16 %v753
    %v825 = vunpack.c.l.b16 %v754
    %v826 = vunpack.c.l.b16 %v755
    %v827 = vunpack.c.l.b16 %v756
    %v828 = vunpack.c.l.b16 %v757
    %v829 = vunpack.c.l.b16 %v758
    %v830 = vunpack.c.l.b16 %v759
    %v831 = vunpack.c.l.b16 %v760
    %v832 = vunpack.c.l.b16 %v761
    %v833 = vunpack.c.l.b16 %v762
    %v834 = vunpack.c.l.b16 %v763
    %v835 = vunpack.c.l.b16 %v764
    %v836 = vunpack.c.l.b16 %v765
    %v837 = vunpack.c.l.b16 %v766
    %v838 = vunpack.c.l.b16 %v767
    %v839 = vunpack.c.l.b16 %v768
    %v840 = vunpack.c.l.b16 %v769
    %v841 = vunpack.c.l.b16 %v770
    %v842 = vunpack.c.l.b16 %v771
    %v843 = vunpack.c.l.b16 %v772
    %v844 = vunpack.c.l.b16 %v773
    %v845 = vunpack.c.l.b16 %v774
    %v846 = vunpack.c.l.b16 %v775
    %v847 = vunpack.c.l.b16 %v776
    %v848 = vunpack.c.l.b16 %v777
    %v849 = vpack.c.b16 %v818, %v817
    %v850 = vpack.c.b16 %v820, %v819
    %v851 = vpack.c.b16 %v822, %v821
    %v852 = vpack.c.b16 %v824, %v823
    %v853 = vpack.c.b16 %v826, %v825
    %v854 = vpack.c.b16 %v828, %v827
    %v855 = vpack.c.b16 %v830, %v829
    %v856 = vpack.c.b16 %v832, %v831
    %v857 = vpack.c.b16 %v834, %v833
    %v858 = vpack.c.b16 %v836, %v835
    %v859 = vpack.c.b16 %v838, %v837
    %v860 = vpack.c.b16 %v840, %v839
    %v861 = vpack.c.b16 %v842, %v841
    %v862 = vpack.c.b16 %v844, %v843
    %v863 = vpack.c.b16 %v846, %v845
    %v864 = vpack.c.b16 %v848, %v847
    %881 = vmatprep.subr.bf16.mxu0 0
    %882 = vmatpush1.bf16.msra.mxu0 %v849
    %883 = vmatprep.subr.bf16.mxu0 0
    %884 = vmatpush1.bf16.msra.mxu0 %v850
    %885 = vmatprep.subr.bf16.mxu0 0
    %886 = vmatpush1.bf16.msra.mxu0 %v851
    %887 = vmatprep.subr.bf16.mxu0 0
    %888 = vmatpush1.bf16.msra.mxu0 %v852
    %889 = vmatprep.subr.bf16.mxu0 0
    %890 = vmatpush1.bf16.msra.mxu0 %v853
    %891 = vmatprep.subr.bf16.mxu0 0
    %892 = vmatpush1.bf16.msra.mxu0 %v854
    %893 = vmatprep.subr.bf16.mxu0 0
    %894 = vmatpush1.bf16.msra.mxu0 %v855
    %895 = vmatprep.subr.bf16.mxu0 0
    %896 = vmatpush1.bf16.msra.mxu0 %v856
    %897 = vmatprep.subr.bf16.mxu0 0
    %898 = vmatpush1.bf16.msra.mxu0 %v857
    %899 = vmatprep.subr.bf16.mxu0 0
    %900 = vmatpush1.bf16.msra.mxu0 %v858
    %901 = vmatprep.subr.bf16.mxu0 0
    %902 = vmatpush1.bf16.msra.mxu0 %v859
    %903 = vmatprep.subr.bf16.mxu0 0
    %904 = vmatpush1.bf16.msra.mxu0 %v860
    %905 = vmatprep.subr.bf16.mxu0 0
    %906 = vmatpush1.bf16.msra.mxu0 %v861
    %907 = vmatprep.subr.bf16.mxu0 0
    %908 = vmatpush1.bf16.msra.mxu0 %v862
    %909 = vmatprep.subr.bf16.mxu0 0
    %910 = vmatpush1.bf16.msra.mxu0 %v863
    %911 = vmatprep.subr.bf16.mxu0 0
    %912 = vmatpush1.bf16.msra.mxu0 %v864
    %913 = vmatprep.mubr.bf16.mxu0 %v745
    %914 = vmatmul.mubr.bf16.gmra.mrb[0].mxu0 %v744
    %v915 = vpop.f32.mrb[0].mxu0
    %v916 = vadd.f32 %v783, %v915
    %v917 = vpop.f32.mrb[0].mxu0
    %v918 = vpop.f32.mrb[0].mxu0
    %v919 = vpop.f32.mrb[0].mxu0
    %920 = vdwg.mxu0
    %v921 = vmax.f32 %v916, 0.0
    %v922 = vld [vmem:[#allocation5] sm:$0xff]
    %v923 = vpack.c.bf16 %v922, %v922
    %v925 = vsel %vm170, %v923, 0
    %927 = vmatprep.subr.bf16.mxu0 %v155
    %928 = vmatpush1.bf16.msra.mxu0 %v154
    %929 = vmatprep.subr.bf16.mxu0 %v159
    %930 = vmatpush1.bf16.msra.mxu0 %v158
    %931 = vmatprep.subr.bf16.mxu0 0
    %932 = vmatpush1.bf16.msra.mxu0 0
    %933 = vmatprep.subr.bf16.mxu0 0
    %934 = vmatpush1.bf16.msra.mxu0 0
    %935 = vmatprep.subr.bf16.mxu0 0
    %936 = vmatpush1.bf16.msra.mxu0 0
    %937 = vmatprep.subr.bf16.mxu0 0
    %938 = vmatpush1.bf16.msra.mxu0 0
    %939 = vmatprep.subr.bf16.mxu0 0
    %940 = vmatpush1.bf16.msra.mxu0 0
    %941 = vmatprep.subr.bf16.mxu0 0
    %942 = vmatpush1.bf16.msra.mxu0 0
    %943 = vmatprep.subr.bf16.mxu0 0
    %944 = vmatpush1.bf16.msra.mxu0 0
    %945 = vmatprep.subr.bf16.mxu0 0
    %946 = vmatpush1.bf16.msra.mxu0 0
    %947 = vmatprep.subr.bf16.mxu0 0
    %948 = vmatpush1.bf16.msra.mxu0 0
    %949 = vmatprep.subr.bf16.mxu0 0
    %950 = vmatpush1.bf16.msra.mxu0 0
    %951 = vmatprep.subr.bf16.mxu0 0
    %952 = vmatpush1.bf16.msra.mxu0 0
    %953 = vmatprep.subr.bf16.mxu0 0
    %954 = vmatpush1.bf16.msra.mxu0 0
    %955 = vmatprep.subr.bf16.mxu0 0
    %956 = vmatpush1.bf16.msra.mxu0 0
    %957 = vmatprep.subr.bf16.mxu0 0
    %958 = vmatpush1.bf16.msra.mxu0 0
    %959 = vmatprep.mubr.bf16.mxu0 0
    %960 = vmatmul.mubr.bf16.gmra.mrb[0].mxu0 %v925
    %v961 = vpop.f32.mrb[0].mxu0
    %v962 = vadd.f32 %v113, %v961
    %v963 = vpop.f32.mrb[0].mxu0
    %v964 = vadd.f32 %v117, %v963
    %v965 = vpop.f32.mrb[0].mxu0
    %v966 = vpop.f32.mrb[0].mxu0
    %967 = vdwg.mxu0
    %968 = vmatprep.subr.bf16.mxu0 %v157
    %969 = vmatpush1.bf16.msra.mxu0 %v156
    %970 = vmatprep.subr.bf16.mxu0 %v161
    %971 = vmatpush1.bf16.msra.mxu0 %v160
    %972 = vmatprep.subr.bf16.mxu0 0
    %973 = vmatpush1.bf16.msra.mxu0 0
    %974 = vmatprep.subr.bf16.mxu0 0
    %975 = vmatpush1.bf16.msra.mxu0 0
    %976 = vmatprep.subr.bf16.mxu0 0
    %977 = vmatpush1.bf16.msra.mxu0 0
    %978 = vmatprep.subr.bf16.mxu0 0
    %979 = vmatpush1.bf16.msra.mxu0 0
    %980 = vmatprep.subr.bf16.mxu0 0
    %981 = vmatpush1.bf16.msra.mxu0 0
    %982 = vmatprep.subr.bf16.mxu0 0
    %983 = vmatpush1.bf16.msra.mxu0 0
    %984 = vmatprep.subr.bf16.mxu0 0
    %985 = vmatpush1.bf16.msra.mxu0 0
    %986 = vmatprep.subr.bf16.mxu0 0
    %987 = vmatpush1.bf16.msra.mxu0 0
    %988 = vmatprep.subr.bf16.mxu0 0
    %989 = vmatpush1.bf16.msra.mxu0 0
    %990 = vmatprep.subr.bf16.mxu0 0
    %991 = vmatpush1.bf16.msra.mxu0 0
    %992 = vmatprep.subr.bf16.mxu0 0
    %993 = vmatpush1.bf16.msra.mxu0 0
    %994 = vmatprep.subr.bf16.mxu0 0
    %995 = vmatpush1.bf16.msra.mxu0 0
    %996 = vmatprep.subr.bf16.mxu0 0
    %997 = vmatpush1.bf16.msra.mxu0 0
    %998 = vmatprep.subr.bf16.mxu0 0
    %999 = vmatpush1.bf16.msra.mxu0 0
    %1000 = vmatprep.mubr.bf16.mxu0 0
    %1001 = vmatmul.mubr.bf16.gmra.mrb[0].mxu0 %v925
    %v1002 = vpop.f32.mrb[0].mxu0
    %v1003 = vadd.f32 %v121, %v1002
    %v1004 = vpop.f32.mrb[0].mxu0
    %v1005 = vadd.f32 %v125, %v1004
    %v1006 = vpop.f32.mrb[0].mxu0
    %v1007 = vpop.f32.mrb[0].mxu0
    %1008 = vdwg.mxu0
    %v1009 = vmax.f32 %v962, 0.0
    %v1010 = vmax.f32 %v964, 0.0
    %v1011 = vmax.f32 %v1003, 0.0
    %v1012 = vmax.f32 %v1005, 0.0
    %v1013 = vpack.c.bf16 %v1009, %v1009
    %v1014 = vpack.c.bf16 %v1010, %v1010
    %v1015 = vpack.c.bf16 %v1011, %v1011
    %v1016 = vpack.c.bf16 %v1012, %v1012
    %1017 = vmatprep.subr.bf16.mxu0 %v533
    %1018 = vmatpush1.bf16.msra.mxu0 %v532
    %1019 = vmatprep.subr.bf16.mxu0 %v535
    %1020 = vmatpush1.bf16.msra.mxu0 %v534
    %1021 = vmatprep.subr.bf16.mxu0 %v537
    %1022 = vmatpush1.bf16.msra.mxu0 %v536
    %1023 = vmatprep.subr.bf16.mxu0 %v539
    %1024 = vmatpush1.bf16.msra.mxu0 %v538
    %1025 = vmatprep.subr.bf16.mxu0 %v541
    %1026 = vmatpush1.bf16.msra.mxu0 %v540
    %1027 = vmatprep.subr.bf16.mxu0 %v543
    %1028 = vmatpush1.bf16.msra.mxu0 %v542
    %1029 = vmatprep.subr.bf16.mxu0 %v545
    %1030 = vmatpush1.bf16.msra.mxu0 %v544
    %1031 = vmatprep.subr.bf16.mxu0 %v547
    %1032 = vmatpush1.bf16.msra.mxu0 %v546
    %1033 = vmatprep.subr.bf16.mxu0 %v549
    %1034 = vmatpush1.bf16.msra.mxu0 %v548
    %1035 = vmatprep.subr.bf16.mxu0 %v551
    %1036 = vmatpush1.bf16.msra.mxu0 %v550
    %1037 = vmatprep.subr.bf16.mxu0 %v553
    %1038 = vmatpush1.bf16.msra.mxu0 %v552
    %1039 = vmatprep.subr.bf16.mxu0 %v555
    %1040 = vmatpush1.bf16.msra.mxu0 %v554
    %1041 = vmatprep.subr.bf16.mxu0 %v557
    %1042 = vmatpush1.bf16.msra.mxu0 %v556
    %1043 = vmatprep.subr.bf16.mxu0 %v559
    %1044 = vmatpush1.bf16.msra.mxu0 %v558
    %1045 = vmatprep.subr.bf16.mxu0 %v561
    %1046 = vmatpush1.bf16.msra.mxu0 %v560
    %1047 = vmatprep.subr.bf16.mxu0 %v563
    %1048 = vmatpush1.bf16.msra.mxu0 %v562
    %1049 = vmatprep.mubr.bf16.mxu0 %v1014
    %1050 = vmatmul.mubr.bf16.gmra.mrb[0].mxu0 %v1013
    %v1051 = vpop.f32.mrb[0].mxu0
    %v1052 = vadd.f32 %v333, %v1051
    %v1053 = vpop.f32.mrb[0].mxu0
    %v1054 = vadd.f32 %v337, %v1053
    %v1055 = vpop.f32.mrb[0].mxu0
    %v1056 = vpop.f32.mrb[0].mxu0
    %1057 = vdwg.mxu0
    %1058 = vmatprep.subr.bf16.mxu0 %v565
    %1059 = vmatpush1.bf16.msra.mxu0 %v564
    %1060 = vmatprep.subr.bf16.mxu0 %v567
    %1061 = vmatpush1.bf16.msra.mxu0 %v566
    %1062 = vmatprep.subr.bf16.mxu0 %v569
    %1063 = vmatpush1.bf16.msra.mxu0 %v568
    %1064 = vmatprep.subr.bf16.mxu0 %v571
    %1065 = vmatpush1.bf16.msra.mxu0 %v570
    %1066 = vmatprep.subr.bf16.mxu0 %v573
    %1067 = vmatpush1.bf16.msra.mxu0 %v572
    %1068 = vmatprep.subr.bf16.mxu0 %v575
    %1069 = vmatpush1.bf16.msra.mxu0 %v574
    %1070 = vmatprep.subr.bf16.mxu0 %v577
    %1071 = vmatpush1.bf16.msra.mxu0 %v576
    %1072 = vmatprep.subr.bf16.mxu0 %v579
    %1073 = vmatpush1.bf16.msra.mxu0 %v578
    %1074 = vmatprep.subr.bf16.mxu0 %v581
    %1075 = vmatpush1.bf16.msra.mxu0 %v580
    %1076 = vmatprep.subr.bf16.mxu0 %v583
    %1077 = vmatpush1.bf16.msra.mxu0 %v582
    %1078 = vmatprep.subr.bf16.mxu0 %v585
    %1079 = vmatpush1.bf16.msra.mxu0 %v584
    %1080 = vmatprep.subr.bf16.mxu0 %v587
    %1081 = vmatpush1.bf16.msra.mxu0 %v586
    %1082 = vmatprep.subr.bf16.mxu0 %v589
    %1083 = vmatpush1.bf16.msra.mxu0 %v588
    %1084 = vmatprep.subr.bf16.mxu0 %v591
    %1085 = vmatpush1.bf16.msra.mxu0 %v590
    %1086 = vmatprep.subr.bf16.mxu0 %v593
    %1087 = vmatpush1.bf16.msra.mxu0 %v592
    %1088 = vmatprep.subr.bf16.mxu0 %v595
    %1089 = vmatpush1.bf16.msra.mxu0 %v594
    %1090 = vmatprep.mubr.bf16.mxu0 %v1016
    %1091 = vmatmul.mubr.bf16.gmra.mrb[0].mxu0 %v1015
    %v1092 = vpop.f32.mrb[0].mxu0
    %v1093 = vadd.f32 %v1052, %v1092
    %v1094 = vpop.f32.mrb[0].mxu0
    %v1095 = vadd.f32 %v1054, %v1094
    %v1096 = vpop.f32.mrb[0].mxu0
    %v1097 = vpop.f32.mrb[0].mxu0
    %1098 = vdwg.mxu0
    %v1099 = vmax.f32 %v1093, 0.0
    %v1100 = vmax.f32 %v1095, 0.0
    %v1101 = vpack.c.bf16 %v1099, %v1099
    %v1102 = vpack.c.bf16 %v1100, %v1100
    %1103 = vmatprep.subr.bf16.mxu0 0
    %1104 = vmatpush1.bf16.msra.mxu0 %v849
    %1105 = vmatprep.subr.bf16.mxu0 0
    %1106 = vmatpush1.bf16.msra.mxu0 %v850
    %1107 = vmatprep.subr.bf16.mxu0 0
    %1108 = vmatpush1.bf16.msra.mxu0 %v851
    %1109 = vmatprep.subr.bf16.mxu0 0
    %1110 = vmatpush1.bf16.msra.mxu0 %v852
    %1111 = vmatprep.subr.bf16.mxu0 0
    %1112 = vmatpush1.bf16.msra.mxu0 %v853
    %1113 = vmatprep.subr.bf16.mxu0 0
    %1114 = vmatpush1.bf16.msra.mxu0 %v854
    %1115 = vmatprep.subr.bf16.mxu0 0
    %1116 = vmatpush1.bf16.msra.mxu0 %v855
    %1117 = vmatprep.subr.bf16.mxu0 0
    %1118 = vmatpush1.bf16.msra.mxu0 %v856
    %1119 = vmatprep.subr.bf16.mxu0 0
    %1120 = vmatpush1.bf16.msra.mxu0 %v857
    %1121 = vmatprep.subr.bf16.mxu0 0
    %1122 = vmatpush1.bf16.msra.mxu0 %v858
    %1123 = vmatprep.subr.bf16.mxu0 0
    %1124 = vmatpush1.bf16.msra.mxu0 %v859
    %1125 = vmatprep.subr.bf16.mxu0 0
    %1126 = vmatpush1.bf16.msra.mxu0 %v860
    %1127 = vmatprep.subr.bf16.mxu0 0
    %1128 = vmatpush1.bf16.msra.mxu0 %v861
    %1129 = vmatprep.subr.bf16.mxu0 0
    %1130 = vmatpush1.bf16.msra.mxu0 %v862
    %1131 = vmatprep.subr.bf16.mxu0 0
    %1132 = vmatpush1.bf16.msra.mxu0 %v863
    %1133 = vmatprep.subr.bf16.mxu0 0
    %1134 = vmatpush1.bf16.msra.mxu0 %v864
    %1135 = vmatprep.mubr.bf16.mxu0 %v1102
    %1136 = vmatmul.mubr.bf16.gmra.mrb[0].mxu0 %v1101
    %v1137 = vpop.f32.mrb[0].mxu0
    %v1138 = vadd.f32 %v783, %v1137
    %v1139 = vpop.f32.mrb[0].mxu0
    %v1140 = vpop.f32.mrb[0].mxu0
    %v1141 = vpop.f32.mrb[0].mxu0
    %1142 = vdwg.mxu0
    %v1143 = vmax.f32 %v1138, 0.0
    %v1144 = vsub.f32 %v921, %v1143
    %v1145 = vld [vmem:[%s8] sm:$0x1]
    %1146 = vmatprep.subr.mxu0 0.0
    %1147 = vmatpush1.xpose.msra.mxu0 %v1144
    %1148 = vmatprep.subr.mxu0 0.0
    %1149 = vmatpush1.xpose.msra.mxu0 0.0
    %1150 = vmatprep.subr.mxu0 0.0
    %1151 = vmatpush1.xpose.msra.mxu0 0.0
    %1152 = vmatprep.subr.mxu0 0.0
    %1153 = vmatpush1.xpose.msra.mxu0 0.0
    %1154 = vmatprep.subr.mxu0 0.0
    %1155 = vmatpush1.xpose.msra.mxu0 0.0
    %1156 = vmatprep.subr.mxu0 0.0
    %1157 = vmatpush1.xpose.msra.mxu0 0.0
    %1158 = vmatprep.subr.mxu0 0.0
    %1159 = vmatpush1.xpose.msra.mxu0 0.0
    %1160 = vmatprep.subr.mxu0 0.0
    %1161 = vmatpush1.xpose.msra.mxu0 0.0
    %1162 = vmatprep.subr.mxu0 0.0
    %1163 = vmatpush1.xpose.msra.mxu0 0.0
    %1164 = vmatprep.subr.mxu0 0.0
    %1165 = vmatpush1.xpose.msra.mxu0 0.0
    %1166 = vmatprep.subr.mxu0 0.0
    %1167 = vmatpush1.xpose.msra.mxu0 0.0
    %1168 = vmatprep.subr.mxu0 0.0
    %1169 = vmatpush1.xpose.msra.mxu0 0.0
    %1170 = vmatprep.subr.mxu0 0.0
    %1171 = vmatpush1.xpose.msra.mxu0 0.0
    %1172 = vmatprep.subr.mxu0 0.0
    %1173 = vmatpush1.xpose.msra.mxu0 0.0
    %1174 = vmatprep.subr.mxu0 0.0
    %1175 = vmatpush1.xpose.msra.mxu0 0.0
    %1176 = vmatprep.subr.mxu0 0.0
    %1177 = vmatpush1.xpose.msra.mxu0 0.0
    %1178 = vmatprep.subr.mxu0 0.0
    %1179 = vmatpush1.xpose.msra.mxu0 0.0
    %1180 = vmatprep.subr.mxu0 0.0
    %1181 = vmatpush1.xpose.msra.mxu0 0.0
    %1182 = vmatprep.subr.mxu0 0.0
    %1183 = vmatpush1.xpose.msra.mxu0 0.0
    %1184 = vmatprep.subr.mxu0 0.0
    %1185 = vmatpush1.xpose.msra.mxu0 0.0
    %1186 = vmatprep.subr.mxu0 0.0
    %1187 = vmatpush1.xpose.msra.mxu0 0.0
    %1188 = vmatprep.subr.mxu0 0.0
    %1189 = vmatpush1.xpose.msra.mxu0 0.0
    %1190 = vmatprep.subr.mxu0 0.0
    %1191 = vmatpush1.xpose.msra.mxu0 0.0
    %1192 = vmatprep.subr.mxu0 0.0
    %1193 = vmatpush1.xpose.msra.mxu0 0.0
    %1194 = vmatprep.subr.mxu0 0.0
    %1195 = vmatpush1.xpose.msra.mxu0 0.0
    %1196 = vmatprep.subr.mxu0 0.0
    %1197 = vmatpush1.xpose.msra.mxu0 0.0
    %1198 = vmatprep.subr.mxu0 0.0
    %1199 = vmatpush1.xpose.msra.mxu0 0.0
    %1200 = vmatprep.subr.mxu0 0.0
    %1201 = vmatpush1.xpose.msra.mxu0 0.0
    %1202 = vmatprep.subr.mxu0 0.0
    %1203 = vmatpush1.xpose.msra.mxu0 0.0
    %1204 = vmatprep.subr.mxu0 0.0
    %1205 = vmatpush1.xpose.msra.mxu0 0.0
    %1206 = vmatprep.subr.mxu0 0.0
    %1207 = vmatpush1.xpose.msra.mxu0 0.0
    %1208 = vmatprep.subr.mxu0 0.0
    %1209 = vmatpush1.xpose.msra.mxu0 0.0
    %1210 = vmatprep.mubr.f32.mxu0 0.0
    %1211 = vmatmul.mubr.f32.gmra.mrb[0].mxu0 %v1145
    %v1212 = vpop.f32.mrb[0].mxu0
    %v1213 = vadd.f32 0.0, %v1212
    %v1214 = vpop.f32.mrb[0].mxu0
    %1215 = vdwg.mxu0
    %v1216 = vxor.u32 %v1213, 2147483648
    %v1217 = vmul.f32 %v1216, 1.442695
    %v1218 = vpow.pop %v1217
    %v1219 = vadd.f32 %v1218, 1.0
    %v1220 = vrcp.pop %v1219
    %v1221 = vmul.f32 1.0, %v1220
    %vm1222 = vcmask 57344
    %1223 = vst.msk [vmem:[#allocation11] sm:$0x1] %vm1222, %v1221
    // Predicated region
    $region58: #{tpu_custom_call.1} parent=1 // pred_check
      _
    $region59: #{tpu_custom_call.1} parent=1 // pred_check_branch
      %1225 = sbr.rel (0) target = $region61
    $region60: #{tpu_custom_call.1} parent=1 // pred_region
      %s1227 = ssub.s32 16, 16
      %1228 = vsyncadd [#allocation4], %s1227
      %s1230 = sshll.u32 [#allocation11], 4
      %s1231 = int_to_ptr.vmem [resolvable:$true] %s1230
      %1233 = dma.vmem_to_hbm [thread:$0]  %s1231, 16, %s9, [#allocation4]
    $region61: #{tpu_custom_call.1} parent=1 // pred_fallthru
      _
    // Predicated region
    $region62: #{tpu_custom_call.1} parent=1 // pred_check
      _
    $region63: #{tpu_custom_call.1} parent=1 // pred_check_branch
      %1235 = sbr.rel (0) target = $region65
    $region64: #{tpu_custom_call.1} parent=1 // pred_region
      %1236 = dma.done [#allocation4], 16
    $region65: #{tpu_custom_call.1} parent=1 // pred_fallthru
      _
    %1237 = vsyncpa [#allocation3], 1
    %1238 = vsyncpa [#allocation6], 1
    %1239 = vsyncpa [#allocation9], 1
    %1240 = vsyncpa [#allocation4], 1

</llo_original>
